<compile_context>
chip_gen: v5e
topology: v5e:2x2
jax: 0.10.0
libtpu: 0.0.40
codegen_flags: <defaults>
</compile_context>

<pallas_src>
import functools

import jax
import jax.numpy as jnp
from jax.experimental import pallas as pl
from jax.experimental.pallas import tpu as pltpu

_LANE = 128
_SUBLANE = 8


def _round_up(x: int, m: int) -> int:
    return ((x + m - 1) // m) * m


def _cdiv(a: int, b: int) -> int:
    return -(-a // b)


def _vmem_budget_bytes() -> int:
    """Usable VMEM budget, generation-aware (v5e/v6e: 128 MiB, v7x: 64 MiB)."""
    cap = 64 * 1024 * 1024  # conservative fallback (v7x physical)
    try:
        info = pltpu.get_tpu_info()
        cap = int(getattr(info, "vmem_capacity_bytes", cap)) or cap
    except Exception:
        pass
    return int(cap * 0.70)  # headroom for compiler-internal scratch


# ----------------------------- kernels ------------------------------------- #

def _encoder_kernel(alpha_ref, x_ref, w_ref, b_ref, o_ref):
    # Single-K-tile variant.
    # x_ref: (tm, D_in)  f32   -- cast to the matmul dtype in VMEM (saves a
    #                             wrapper-side HBM read+write pass over x)
    # w_ref: (D_in, tn)  bf16/f32 (pre-transposed Linear weight)
    # b_ref: (1, tn)     f32
    # alpha_ref: (1,)    f32 in SMEM
    # o_ref: (tm, tn)    f32, lane-dense (tn multiple of 128)
    y = jnp.dot(x_ref[...].astype(w_ref.dtype), w_ref[...],
                preferred_element_type=jnp.float32)
    y = y + b_ref[...]
    a = alpha_ref[0]
    o_ref[...] = jnp.where(y > 0.0, y, a * y).astype(o_ref.dtype)


def _encoder_kernel_ksplit(alpha_ref, x_ref, w_ref, b_ref, o_ref, acc_ref):
    # K-split variant: grid = (rows, cols, K); K is innermost / "arbitrary".
    k = pl.program_id(2)

    @pl.when(k == 0)
    def _():
        acc_ref[...] = jnp.zeros_like(acc_ref)

    acc_ref[...] += jnp.dot(x_ref[...].astype(w_ref.dtype), w_ref[...],
                            preferred_element_type=jnp.float32)

    @pl.when(k == pl.num_programs(2) - 1)
    def _():
        y = acc_ref[...] + b_ref[...]
        a = alpha_ref[0]
        o_ref[...] = jnp.where(y > 0.0, y, a * y).astype(o_ref.dtype)


# ----------------------------- planning ------------------------------------ #

def _plan(B, D_in, D_out, use_bf16, max_k):
    D_out_pad = _round_up(D_out, _LANE)
    ib = 2 if use_bf16 else 4
    budget = _vmem_budget_bytes()

    # K (reduction) split only for large D_in (or when explicitly forced).
    k_thresh = max_k if max_k is not None else 2048
    if D_in > k_thresh:
        tk = _round_up(min(max(k_thresh, _LANE), 512 if max_k is None else k_thresh),
                       _LANE)
        D_in_pad = _round_up(D_in, tk)
    else:
        tk = None
        D_in_pad = D_in

    # Row tiling with bounded padding waste (< 8 rows of padding per tile).
    n_row = max(1, _cdiv(B, 512))
    tm = _round_up(_cdiv(B, n_row), _SUBLANE)
    B_pad = n_row * tm

    # Keep the whole (padded) weight resident when it is small -> 1-D grid,
    # single HBM read of the weight, widest lane-dense stores.
    w_resident_bytes = 2 * (D_in_pad * D_out_pad * ib + D_out_pad * 4)
    resident = (tk is None) and (w_resident_bytes <= budget // 4)
    if resident:
        tn = D_out_pad
    elif D_out_pad % 256 == 0:
        tn = 256            # fill the 256-wide MXU on v6e/v7x
    else:
        tn = 128

    def est(tm_):
        kdim = tk if tk is not None else D_in_pad
        e = (2 * tm_ * kdim * 4       # x tiles (f32 in HBM, cast in-kernel)
             + 2 * kdim * tn * ib     # weight tiles
             + 2 * tn * 4             # bias
             + 2 * tm_ * tn * 4)      # output tiles
        if tk is not None:
            e += tm_ * tn * 4         # f32 accumulator scratch
        return e

    # Shrink tm (never the lane-dense output width) until the estimate fits.
    while est(tm) > budget and tm > _SUBLANE:
        tm = max(_SUBLANE, _round_up(tm // 2, _SUBLANE))
    n_row = _cdiv(B, tm)
    B_pad = n_row * tm

    vmem_limit = int(min(budget, max(16 * 1024 * 1024, est(tm) * 3 // 2)))
    return dict(tm=tm, tn=tn, tk=tk, B_pad=B_pad, D_in_pad=D_in_pad,
                D_out_pad=D_out_pad, resident=resident, vmem_limit=vmem_limit)


# ----------------------------- forward ------------------------------------- #

@functools.partial(
    jax.jit,
    static_argnames=("tm", "tn", "tk", "B_pad", "D_in_pad", "D_out_pad",
                     "resident", "vmem_limit", "d_out"))
def _encoder_call(x, w_p, b_p, alpha1, *, tm, tn, tk, B_pad, D_in_pad,
                  D_out_pad, resident, vmem_limit, d_out):
    B, D_in = x.shape

    # Pad x only when the plan requires it (single fusable jnp.pad pass).
    if (B_pad, D_in_pad) != (B, D_in):
        x = jnp.pad(x, ((0, B_pad - B), (0, D_in_pad - D_in)))

    n_row = B_pad // tm
    out_shape = jax.ShapeDtypeStruct((B_pad, D_out_pad), jnp.float32)

    if tk is not None:
        # 3-D grid with K reduction innermost + f32 accumulator scratch.
        out = pl.pallas_call(
            _encoder_kernel_ksplit,
            out_shape=out_shape,
            grid=(n_row, D_out_pad // tn, D_in_pad // tk),
            in_specs=[
                pl.BlockSpec(memory_space=pltpu.SMEM),                   # alpha
                pl.BlockSpec((tm, tk), lambda i, j, k: (i, k)),          # x
                pl.BlockSpec((tk, tn), lambda i, j, k: (k, j)),          # W^T
                pl.BlockSpec((1, tn), lambda i, j, k: (0, j)),           # bias
            ],
            out_specs=pl.BlockSpec((tm, tn), lambda i, j, k: (i, j)),
            scratch_shapes=[pltpu.VMEM((tm, tn), jnp.float32)],
            compiler_params=pltpu.CompilerParams(
                dimension_semantics=("parallel", "parallel", "arbitrary"),
                vmem_limit_bytes=vmem_limit),
        )(alpha1, x, w_p, b_p)
    elif resident:
        # 1-D grid: weight/bias index maps are constant -> single weight DMA.
        out = pl.pallas_call(
            _encoder_kernel,
            out_shape=out_shape,
            grid=(n_row,),
            in_specs=[
                pl.BlockSpec(memory_space=pltpu.SMEM),                   # alpha
                pl.BlockSpec((tm, D_in_pad), lambda i: (i, 0)),          # x
                pl.BlockSpec((D_in_pad, D_out_pad), lambda i: (0, 0)),   # W^T
                pl.BlockSpec((1, D_out_pad), lambda i: (0, 0)),          # bias
            ],
            out_specs=pl.BlockSpec((tm, D_out_pad), lambda i: (i, 0)),
            compiler_params=pltpu.CompilerParams(
                dimension_semantics=("parallel",),
                vmem_limit_bytes=vmem_limit),
        )(alpha1, x, w_p, b_p)
    else:
        # 2-D grid over rows x output features.
        out = pl.pallas_call(
            _encoder_kernel,
            out_shape=out_shape,
            grid=(n_row, D_out_pad // tn),
            in_specs=[
                pl.BlockSpec(memory_space=pltpu.SMEM),                   # alpha
                pl.BlockSpec((tm, D_in_pad), lambda i, j: (i, 0)),       # x
                pl.BlockSpec((D_in_pad, tn), lambda i, j: (0, j)),       # W^T
                pl.BlockSpec((1, tn), lambda i, j: (0, j)),              # bias
            ],
            out_specs=pl.BlockSpec((tm, tn), lambda i, j: (i, j)),
            compiler_params=pltpu.CompilerParams(
                dimension_semantics=("parallel", "parallel"),
                vmem_limit_bytes=vmem_limit),
        )(alpha1, x, w_p, b_p)

    # Slice is skipped (copy-free) when the padded shape already matches.
    if (B_pad, D_out_pad) != (B, d_out):
        out = out[:B, :d_out]
    return out


class PallasEncoder:
    """Pallas TPU equivalent of `Encoder`: prelu(Linear(input_dim, inter_dim)(x)).

    Weight preparation (transpose + cast + lane-dense padding) is hoisted into
    __init__ since nn.Linear parameters are constant across forward calls.
    """

    def __init__(self, weight, bias, alpha, *, use_bf16=True, max_k=None):
        # weight: (intermediate_dim, input_dim), bias: (intermediate_dim,),
        # alpha: scalar (nn.PReLU single shared parameter).
        D_out, D_in = weight.shape
        self.D_in, self.D_out = D_in, D_out
        self.use_bf16 = use_bf16
        self.max_k = max_k

        p = _plan(1, D_in, D_out, use_bf16, max_k)   # B-independent geometry
        self.D_in_pad, self.D_out_pad = p["D_in_pad"], p["D_out_pad"]

        wd = jnp.bfloat16 if use_bf16 else jnp.float32
        w_p = jnp.asarray(weight).T.astype(wd)                 # (D_in, D_out)
        b_p = jnp.asarray(bias, jnp.float32).reshape(1, D_out)
        if (self.D_in_pad, self.D_out_pad) != (D_in, D_out):
            w_p = jnp.pad(w_p, ((0, self.D_in_pad - D_in),
                                (0, self.D_out_pad - D_out)))
            b_p = jnp.pad(b_p, ((0, 0), (0, self.D_out_pad - D_out)))
        self.w_p, self.b_p = w_p, b_p
        self.alpha1 = jnp.asarray(alpha, jnp.float32).reshape(1)

    def __call__(self, x):
        B = x.shape[0]
        p = _plan(B, self.D_in, self.D_out, self.use_bf16, self.max_k)
        return _encoder_call(
            x, self.w_p, self.b_p, self.alpha1,
            tm=p["tm"], tn=p["tn"], tk=p["tk"], B_pad=p["B_pad"],
            D_in_pad=p["D_in_pad"], D_out_pad=p["D_out_pad"],
            resident=p["resident"], vmem_limit=p["vmem_limit"],
            d_out=self.D_out)


# ----------------------------- self-test ------------------------------------ #

if __name__ == "__main__":
    key = jax.random.PRNGKey(0)

    def make_case(k, batch, input_dim, intermediate_dim):
        kx, kw, kb = jax.random.split(k, 3)
        x = jax.random.normal(kx, (batch, input_dim), dtype=jnp.float32)
        bound = 1.0 / (input_dim ** 0.5)
        w = jax.random.uniform(kw, (intermediate_dim, input_dim),
                               minval=-bound, maxval=bound, dtype=jnp.float32)
        b = jax.random.uniform(kb, (intermediate_dim,),
                               minval=-bound, maxval=bound, dtype=jnp.float32)
        return x, w, b

    def reference(x, w, b, alpha):
        y = jnp.dot(x, w.T, precision=jax.lax.Precision.HIGHEST) + b
        return jnp.where(y > 0.0, y, alpha * y)

    alpha = jnp.float32(0.25)  # nn.PReLU default single shared parameter
    k1, k2, k3 = jax.random.split(key, 3)

    # Case 1: nominal small size (batch=8, input_dim=32, intermediate_dim=64)
    #         -> resident-weight 1-D grid, padded D_out 64 -> 128.
    x1, w1, b1 = make_case(k1, batch=8, input_dim=32, intermediate_dim=64)
    enc1 = PallasEncoder(w1, b1, alpha)
    out1 = jax.block_until_ready(enc1(x1))
    assert out1.shape == (8, 64)
    assert jnp.allclose(out1, reference(x1, w1, b1, alpha), atol=1e-2, rtol=1e-2), \
        "case1 mismatch vs reference"

    # Case 2: non-multiple batch + wider output (row padding, resident weight).
    x2, w2, b2 = make_case(k2, batch=300, input_dim=32, intermediate_dim=192)
    enc2 = PallasEncoder(w2, b2, alpha)
    out2 = jax.block_until_ready(enc2(x2))
    assert out2.shape == (300, 192)
    assert jnp.allclose(out2, reference(x2, w2, b2, alpha), atol=1e-2, rtol=1e-2), \
        "case2 mismatch vs reference"

    # Case 3: force the K-split accumulator path (max_k=128 -> 2 K steps).
    x3, w3, b3 = make_case(k3, batch=64, input_dim=256, intermediate_dim=128)
    enc3 = PallasEncoder(w3, b3, alpha, max_k=128)
    out3 = jax.block_until_ready(enc3(x3))
    assert out3.shape == (64, 128)
    assert jnp.allclose(out3, reference(x3, w3, b3, alpha), atol=1e-2, rtol=1e-2), \
        "case3 mismatch vs reference"

    print("KERNEL_OK")
</pallas_src>

<mosaic_0001>
module attributes {stable_mosaic.version = 11 : i64} {
  func.func @_encoder_kernel(%arg0: i32, %arg1: memref<1xf32, #tpu.memory_space<smem>>, %arg2: memref<8x32xf32, #tpu.memory_space<vmem>>, %arg3: memref<32x128xbf16, #tpu.memory_space<vmem>>, %arg4: memref<1x128xf32, #tpu.memory_space<vmem>>, %arg5: memref<8x128xf32, #tpu.memory_space<vmem>>) attributes {dimension_semantics = [#tpu.dimension_semantics<parallel>], iteration_bounds = array<i64: 1>, scalar_prefetch = 0 : i64, scratch_operands = 0 : i64, tpu.core_type = #tpu.core_type<tc>, window_params = [{transform_indices = @transform_0, window_bounds = array<i64: 1>}, {transform_indices = @transform_1, window_bounds = array<i64: 8, 32>}, {pipeline_mode = #tpu.pipeline_mode<synchronous>, transform_indices = @transform_2, window_bounds = array<i64: 32, 128>}, {pipeline_mode = #tpu.pipeline_mode<synchronous>, transform_indices = @transform_3, window_bounds = array<i64: 1, 128>}, {transform_indices = @transform_4, window_bounds = array<i64: 8, 128>}]} {
    %c0 = arith.constant 0 : index
    %c0_0 = arith.constant 0 : index
    %0 = vector.load %arg2[%c0, %c0_0] : memref<8x32xf32, #tpu.memory_space<vmem>>, vector<8x32xf32>
    %1 = arith.truncf %0 : vector<8x32xf32> to vector<8x32xbf16>
    %c0_1 = arith.constant 0 : index
    %c0_2 = arith.constant 0 : index
    %2 = vector.load %arg3[%c0_1, %c0_2] : memref<32x128xbf16, #tpu.memory_space<vmem>>, vector<32x128xbf16>
    %cst = arith.constant dense<0.000000e+00> : vector<8x128xf32>
    %3 = tpu.matmul %1, %2, %cst {dimension_numbers = #tpu.dot_dimension_numbers<[1], [0], [0], [1], [0, 0, 1, 1], [], []>} : vector<8x32xbf16>, vector<32x128xbf16>, vector<8x128xf32> -> vector<8x128xf32>
    %c0_3 = arith.constant 0 : index
    %c0_4 = arith.constant 0 : index
    %4 = vector.load %arg4[%c0_3, %c0_4] : memref<1x128xf32, #tpu.memory_space<vmem>>, vector<1x128xf32>
    %5 = vector.broadcast %4 : vector<1x128xf32> to vector<8x128xf32>
    %6 = arith.addf %3, %5 : vector<8x128xf32>
    %c0_5 = arith.constant 0 : index
    %7 = memref.load %arg1[%c0_5] : memref<1xf32, #tpu.memory_space<smem>>
    %cst_6 = arith.constant 0.000000e+00 : f32
    %8 = vector.broadcast %cst_6 : f32 to vector<8x128xf32>
    %9 = arith.cmpf ogt, %6, %8 : vector<8x128xf32>
    %10 = vector.broadcast %7 : f32 to vector<8x128xf32>
    %11 = arith.mulf %10, %6 : vector<8x128xf32>
    %12 = arith.select %9, %6, %11 : vector<8x128xi1>, vector<8x128xf32>
    %c0_7 = arith.constant 0 : index
    %c0_8 = arith.constant 0 : index
    %13 = vector.load %arg5[%c0_7, %c0_8] : memref<8x128xf32, #tpu.memory_space<vmem>>, vector<8x128xf32>
    tpu.vector_store %arg5[%c0_7, %c0_8], %12 {strides = array<i32>} : memref<8x128xf32, #tpu.memory_space<vmem>>, vector<8x128xf32>,
    return
  }
  func.func @transform_0(%arg0: i32) -> i32 {
    %c0_i32 = arith.constant 0 : i32
    %c0_i32_0 = arith.constant 0 : i32
    return %c0_i32 : i32
  }
  func.func @transform_1(%arg0: i32) -> (i32, i32) {
    %c0_i32 = arith.constant 0 : i32
    %c0_i32_0 = arith.constant 0 : i32
    return %arg0, %c0_i32 : i32, i32
  }
  func.func @transform_2(%arg0: i32) -> (i32, i32) {
    %c0_i32 = arith.constant 0 : i32
    %c0_i32_0 = arith.constant 0 : i32
    %c0_i32_1 = arith.constant 0 : i32
    return %c0_i32, %c0_i32_0 : i32, i32
  }
  func.func @transform_3(%arg0: i32) -> (i32, i32) {
    %c0_i32 = arith.constant 0 : i32
    %c0_i32_0 = arith.constant 0 : i32
    %c0_i32_1 = arith.constant 0 : i32
    return %c0_i32, %c0_i32_0 : i32, i32
  }
  func.func @transform_4(%arg0: i32) -> (i32, i32) {
    %c0_i32 = arith.constant 0 : i32
    %c0_i32_0 = arith.constant 0 : i32
    return %arg0, %c0_i32 : i32, i32
  }
}

</mosaic_0001>

<llo_original>
// kernel: _encoder_call.1
$region0: #{_encoder_call.1}
  #allocation0 [shape = 'u32[]', space=smem, size = 0x4, offset = 0x4, fixed_abs, tag = 'smem constant byte address 0x4 - core index']
  #allocation1 [shape = 'u32[72,128]{1,0:T(1,128)}', space=vmem, size = 0x9000, scoped, tag = 'internal scratch']
  #allocation2 [shape = 'f32[1]{0:T(128)S(6)}', space=smem, size = 0x200, scoped, tag = 'scoped memory for _encoder_call.1']
  %s0 = inlined_call_operand.<no memory space> [shape: f32[1], index: 0, kind: input, shape index: {}]
  %s1 = inlined_call_operand.hbm [shape: f32[8,32], index: 1, kind: input, shape index: {}]
  %s2 = inlined_call_operand.hbm [shape: bf16[32,128], index: 2, kind: input, shape index: {}]
  %s3 = inlined_call_operand.vmem [shape: f32[1,128], index: 3, kind: input, shape index: {}]
  %s4 = inlined_call_operand.hbm [shape: f32[8,128], index: 4, kind: output, shape index: {}]
  %s5 = sld [smem:[#allocation0]]
  $region34: #{_encoder_call.1} parent=0
    _
  %s7 = ssub.s32 1, %s5
  %s8 = scalar_select 0, %s7, %s5
  %9 = sst [smem:[#allocation2]] %s0
  $region1: #{_encoder_call.1} parent=0
    #allocation3 [shape = 'u8[4096]{0}', space=vmem, size = 0x1000, scoped, tag = 'input window, operand 1, single buffered']
    #allocation4 [shape = 's32[1]{0}', space=sflag, size = 0x4, scoped, tag = 'scoped memory for _encoder_call.1']
    #allocation5 [shape = 's32[1]{0}', space=sflag, size = 0x4, scoped, tag = 'scoped memory for _encoder_call.1']
    #allocation6 [shape = 'u8[8192]{0}', space=vmem, size = 0x2000, scoped, tag = 'input window, operand 2, single buffered']
    #allocation7 [shape = 's32[1]{0}', space=sflag, size = 0x4, scoped, tag = 'scoped memory for _encoder_call.1']
    #allocation8 [shape = 'u8[4096]{0}', space=vmem, size = 0x1000, scoped, tag = 'output window, operand 0, single buffered']
    %10 = vsyncpa [#allocation4], 0
    %11 = vsyncpa [#allocation7], 0
    %12 = vsyncpa [#allocation5], 0
    // Predicated region
    $region2: #{_encoder_call.1} parent=1 // pred_check
      _
    $region3: #{_encoder_call.1} parent=1 // pred_check_branch
      %14 = sbr.rel (0) target = $region5
    $region4: #{_encoder_call.1} parent=1 // pred_region
      _
    $region5: #{_encoder_call.1} parent=1 // pred_fallthru
      _
    // Predicated region
    $region6: #{_encoder_call.1} parent=1 // pred_check
      _
    $region7: #{_encoder_call.1} parent=1 // pred_check_branch
      %16 = sbr.rel (0) target = $region9
    $region8: #{_encoder_call.1} parent=1 // pred_region
      %18 = vsyncadd [#allocation4], 0
      %s20 = sshll.u32 %s1, 4
      %s21 = int_to_ptr.hbm [resolvable:$true] %s20
      %s22 = sshll.u32 [#allocation3], 4
      %s23 = int_to_ptr.vmem [resolvable:$true] %s22
      %25 = dma.hbm_to_vmem [thread:$0]  %s21, 128, %s23, [#allocation4]
    $region9: #{_encoder_call.1} parent=1 // pred_fallthru
      _
    // Predicated region
    $region10: #{_encoder_call.1} parent=1 // pred_check
      _
    $region11: #{_encoder_call.1} parent=1 // pred_check_branch
      %27 = sbr.rel (0) target = $region13
    $region12: #{_encoder_call.1} parent=1 // pred_region
      %29 = vsyncadd [#allocation7], 0
      %s30 = sshll.u32 %s2, 4
      %s31 = int_to_ptr.hbm [resolvable:$true] %s30
      %s32 = sshll.u32 [#allocation6], 4
      %s33 = int_to_ptr.vmem [resolvable:$true] %s32
      %38 = dma.hbm_to_vmem [thread:$0]  %s31, 256, %s33, [#allocation7], 64, 64, 4
    $region13: #{_encoder_call.1} parent=1 // pred_fallthru
      _
    // Predicated region
    $region14: #{_encoder_call.1} parent=1 // pred_check
      _
    $region15: #{_encoder_call.1} parent=1 // pred_check_branch
      %40 = sbr.rel (0) target = $region17
    $region16: #{_encoder_call.1} parent=1 // pred_region
      _
    $region17: #{_encoder_call.1} parent=1 // pred_fallthru
      _
    // Predicated region
    $region18: #{_encoder_call.1} parent=1 // pred_check
      _
    $region19: #{_encoder_call.1} parent=1 // pred_check_branch
      %42 = sbr.rel (0) target = $region21
    $region20: #{_encoder_call.1} parent=1 // pred_region
      %44 = dma.done [#allocation4], 128
    $region21: #{_encoder_call.1} parent=1 // pred_fallthru
      _
    // Predicated region
    $region22: #{_encoder_call.1} parent=1 // pred_check
      _
    $region23: #{_encoder_call.1} parent=1 // pred_check_branch
      %46 = sbr.rel (0) target = $region25
    $region24: #{_encoder_call.1} parent=1 // pred_region
      %48 = dma.done [#allocation7], 256
    $region25: #{_encoder_call.1} parent=1 // pred_fallthru
      _
    %v50 = vld [vmem:[#allocation3] sm:$0xff]
    %v51 = vpack.c.bf16 %v50, %v50
    %v52 = vld [vmem:[#allocation6] sm:$0xf]
    %v53 = vld [vmem:[#allocation6 + $0x4] sm:$0xf]
    %v54 = vld [vmem:[#allocation6 + $0x8] sm:$0xf]
    %v55 = vld [vmem:[#allocation6 + $0xc] sm:$0xf]
    %v56 = vld [vmem:[%s3] sm:$0x1]
    %v58 = vperm.slane %v56, 0
    %v64 = vunpack.c.l.b16 %v52
    %v65 = vunpack.c.l.b16 %v53
    %v66 = vunpack.c.l.b16 %v54
    %v67 = vunpack.c.l.b16 %v55
    %v68 = vpack.c.b16 %v65, %v64
    %v69 = vpack.c.b16 %v67, %v66
    %vm72 = vcmask 261120
    %v74 = vsel %vm72, %v51, 0
    %76 = vmatpush.bf16.msra.mxu0 0
    %77 = vmatpush.bf16.msra.mxu0 0
    %78 = vmatpush.bf16.msra.mxu0 0
    %79 = vmatpush.bf16.msra.mxu0 0
    %80 = vmatpush.bf16.msra.mxu0 0
    %81 = vmatpush.bf16.msra.mxu0 0
    %82 = vmatpush.bf16.msra.mxu0 %v69
    %83 = vmatpush.bf16.msra.mxu0 %v68
    %84 = vmatmul.bf16.gmra.mxu0 %v74
    %v85 = vpop.f32.mrf.mxu0
    %v86 = vadd.f32 %v58, %v85
    %v87 = vpop.f32.mrf.mxu0
    %88 = vdwg.mxu0
    %s89 = sld [smem:[#allocation2]]
    %vm90 = vcmp.gt.f32.partialorder %v86, 0.0
    %v91 = vstv %s89
    %v92 = vmul.f32 %v91, %v86
    %v93 = vsel %vm90, %v86, %v92
    %94 = vst [vmem:[#allocation8] sm:$0xff] %v93
    // Predicated region
    $region26: #{_encoder_call.1} parent=1 // pred_check
      _
    $region27: #{_encoder_call.1} parent=1 // pred_check_branch
      %96 = sbr.rel (0) target = $region29
    $region28: #{_encoder_call.1} parent=1 // pred_region
      %98 = vsyncadd [#allocation5], 0
      %s100 = sshll.u32 [#allocation8], 4
      %s101 = int_to_ptr.vmem [resolvable:$true] %s100
      %s102 = sshll.u32 %s4, 4
      %s103 = int_to_ptr.hbm [resolvable:$true] %s102
      %105 = dma.vmem_to_hbm [thread:$0]  %s101, 128, %s103, [#allocation5]
    $region29: #{_encoder_call.1} parent=1 // pred_fallthru
      _
    // Predicated region
    $region30: #{_encoder_call.1} parent=1 // pred_check
      _
    $region31: #{_encoder_call.1} parent=1 // pred_check_branch
      %107 = sbr.rel (0) target = $region33
    $region32: #{_encoder_call.1} parent=1 // pred_region
      %109 = dma.done [#allocation5], 128
    $region33: #{_encoder_call.1} parent=1 // pred_fallthru
      _
    %110 = vsyncpa [#allocation4], 1
    %111 = vsyncpa [#allocation7], 1
    %112 = vsyncpa [#allocation5], 1

</llo_original>
